<compile_context>
chip_gen: v6e
topology: v6e:2x2x1
jax: 0.10.0
libtpu: 0.0.40
codegen_flags: <defaults>
</compile_context>

<pallas_src>
import jax
import jax.numpy as jnp
from jax.experimental import pallas as pl
from jax.experimental.pallas import tpu as pltpu

INPUT_SIZE = 34
HIDDEN1 = 64
HIDDEN2 = 32
NUM_CLASSES = 2

OUT_PAD = 8      # logits padded 2 -> 8 columns (tiny writeback, safe MXU N dim)
TB_MAX = 4096    # max batch-tile rows (VMEM-safe on v5e/v6e/v7x with the limit below)


def _round_up(n, m):
    return (n + m - 1) // m * m


def _choose_tb(b_pad):
    """Pick the batch tile. b_pad is a multiple of 8 (static)."""
    if b_pad > TB_MAX:
        return TB_MAX
    if b_pad > 1024:
        # Guarantee >= 2 grid steps: DMA/compute overlap + both TensorCores on v7x.
        return _round_up((b_pad + 1) // 2, 8)
    return b_pad


def _mlp_kernel(x_ref, w1_ref, b1_ref, w2_ref, b2_ref, w3_ref, b3_ref, o_ref):
    # bf16 operands on the MXU with f32 accumulation; elementwise work stays f32.
    x = x_ref[...].astype(jnp.bfloat16)
    # Linear(34->64) + ReLU          (Dropout is identity at inference)
    h1 = jnp.dot(x, w1_ref[...], preferred_element_type=jnp.float32)
    h1 = jnp.maximum(h1 + b1_ref[...], 0.0)
    # Linear(64->32) + ReLU          (Dropout is identity at inference)
    h2 = jnp.dot(h1.astype(jnp.bfloat16), w2_ref[...],
                 preferred_element_type=jnp.float32)
    h2 = jnp.maximum(h2 + b2_ref[...], 0.0)
    # Linear(32->2), output columns padded to 8 (pad cols are zero weights/bias)
    o = jnp.dot(h2.astype(jnp.bfloat16), w3_ref[...],
                preferred_element_type=jnp.float32)
    o_ref[...] = (o + b3_ref[...]).astype(o_ref.dtype)
    # TODO(synk): training-mode Dropout (stochastic masking via pltpu.prng_random_bits)
    # is not implemented; eval-mode identity semantics are reproduced instead.


@jax.jit
def _forward_padded(x_pad, params):
    """x_pad: (b_pad, INPUT_SIZE) float32 with b_pad a multiple of 8."""
    w1, b1, w2, b2, w3, b3 = params
    b_pad = x_pad.shape[0]
    tb = _choose_tb(b_pad)
    grid = (pl.cdiv(b_pad, tb),)   # partial tail block is masked on store

    # Weights/biases are tiny (~10 KiB total): full-shape blocks with constant
    # index_maps keep them resident in VMEM across all batch tiles.
    def const_spec(a):
        return pl.BlockSpec(a.shape, lambda i: (0, 0))

    return pl.pallas_call(
        _mlp_kernel,
        out_shape=jax.ShapeDtypeStruct((b_pad, OUT_PAD), jnp.float32),
        grid=grid,
        in_specs=[
            # Full-last-dim block: no feature padding, contiguous HBM rows.
            pl.BlockSpec((tb, INPUT_SIZE), lambda i: (i, 0)),
            const_spec(w1), const_spec(b1),
            const_spec(w2), const_spec(b2),
            const_spec(w3), const_spec(b3),
        ],
        out_specs=pl.BlockSpec((tb, OUT_PAD), lambda i: (i, 0)),
        compiler_params=pltpu.CompilerParams(
            # Batch tiles are independent -> shard across TensorCores on v7x.
            dimension_semantics=("parallel",),
            # Headroom for tb=4096 tiles on all generations (v5e scoped default
            # is 16 MiB; v7x physical VMEM is 64 MiB so 48 MiB still fits).
            vmem_limit_bytes=48 << 20,
        ),
    )(x_pad, w1, b1, w2, b2, w3, b3)


def neural_net_forward(x, params):
    """params must come from prepare_params (bf16 weights, padded logits columns)."""
    # Mirror `if x.dim() == 1: x = x.unsqueeze(0)`
    if x.ndim == 1:
        x = x[None, :]
    b, f = x.shape
    assert f == INPUT_SIZE, f
    b_pad = _round_up(b, 8)
    x_pad = x.astype(jnp.float32)
    if b_pad != b:
        x_pad = jnp.pad(x_pad, ((0, b_pad - b), (0, 0)))
    out = _forward_padded(x_pad, params)
    return out[:b, :NUM_CLASSES]


def init_params(key):
    """PyTorch default Linear init U(-1/sqrt(fan_in), +), weights stored (in, out), f32."""
    ks = jax.random.split(key, 6)

    def lin(kw, kb, fan_in, fan_out):
        bound = 1.0 / jnp.sqrt(fan_in)
        w = jax.random.uniform(kw, (fan_in, fan_out), jnp.float32, -bound, bound)
        b = jax.random.uniform(kb, (1, fan_out), jnp.float32, -bound, bound)
        return w, b

    w1, b1 = lin(ks[0], ks[1], INPUT_SIZE, HIDDEN1)
    w2, b2 = lin(ks[2], ks[3], HIDDEN1, HIDDEN2)
    w3, b3 = lin(ks[4], ks[5], HIDDEN2, NUM_CLASSES)
    return (w1, b1, w2, b2, w3, b3)


def prepare_params(params):
    """One-time cast of weights to bf16 + pad logits columns 2 -> OUT_PAD (biases stay f32)."""
    w1, b1, w2, b2, w3, b3 = params
    w1p = w1.astype(jnp.bfloat16)
    w2p = w2.astype(jnp.bfloat16)
    w3p = jnp.pad(w3, ((0, 0), (0, OUT_PAD - w3.shape[1]))).astype(jnp.bfloat16)
    b3p = jnp.pad(b3, ((0, 0), (0, OUT_PAD - b3.shape[1])))
    return (w1p, b1, w2p, b2, w3p, b3p)


def _reference(x, params):
    """Pure-JAX f32 reference of the forward pass (eval mode)."""
    if x.ndim == 1:
        x = x[None, :]
    w1, b1, w2, b2, w3, b3 = params
    h1 = jnp.maximum(x @ w1 + b1, 0.0)
    h2 = jnp.maximum(h1 @ w2 + b2, 0.0)
    return h2 @ w3 + b3


if __name__ == "__main__":
    key = jax.random.PRNGKey(0)
    k_params, k_x = jax.random.split(key)

    raw_params = init_params(k_params)
    params = prepare_params(raw_params)

    # Small batch of feature vectors, consistent with input_size=34.
    x = jax.random.normal(k_x, (8, INPUT_SIZE), dtype=jnp.float32)

    out = neural_net_forward(x, params)
    jax.block_until_ready(out)
    assert out.shape == (8, NUM_CLASSES), out.shape

    # Numerics vs. the f32 reference (loose tolerance due to bf16 matmuls).
    ref = _reference(x, raw_params)
    assert jnp.allclose(out, ref, rtol=5e-2, atol=5e-2), (out, ref)

    # 1-D input path (unsqueeze(0) branch).
    out1 = neural_net_forward(x[0], params)
    jax.block_until_ready(out1)
    assert out1.shape == (1, NUM_CLASSES), out1.shape
    assert jnp.allclose(out1, ref[:1], rtol=5e-2, atol=5e-2)

    # Batch that is not a multiple of 8 (exercises row padding + slice).
    x10 = jax.random.normal(jax.random.PRNGKey(1), (10, INPUT_SIZE), jnp.float32)
    out10 = neural_net_forward(x10, params)
    jax.block_until_ready(out10)
    assert out10.shape == (10, NUM_CLASSES), out10.shape
    assert jnp.allclose(out10, _reference(x10, raw_params), rtol=5e-2, atol=5e-2)

    # Multi-tile grid with a partial (masked) tail block: 1032 rows -> tb=520, grid=2.
    xl = jax.random.normal(jax.random.PRNGKey(2), (1032, INPUT_SIZE), jnp.float32)
    outl = neural_net_forward(xl, params)
    jax.block_until_ready(outl)
    assert outl.shape == (1032, NUM_CLASSES), outl.shape
    assert jnp.allclose(outl, _reference(xl, raw_params), rtol=5e-2, atol=5e-2)

    print("KERNEL_OK")
</pallas_src>

<mosaic_0001>
module attributes {stable_mosaic.version = 11 : i64} {
  func.func @_mlp_kernel(%arg0: i32, %arg1: memref<8x34xf32, #tpu.memory_space<vmem>>, %arg2: memref<34x64xbf16, #tpu.memory_space<vmem>>, %arg3: memref<1x64xf32, #tpu.memory_space<vmem>>, %arg4: memref<64x32xbf16, #tpu.memory_space<vmem>>, %arg5: memref<1x32xf32, #tpu.memory_space<vmem>>, %arg6: memref<32x8xbf16, #tpu.memory_space<vmem>>, %arg7: memref<1x8xf32, #tpu.memory_space<vmem>>, %arg8: memref<8x8xf32, #tpu.memory_space<vmem>>) attributes {dimension_semantics = [#tpu.dimension_semantics<parallel>], iteration_bounds = array<i64: 1>, scalar_prefetch = 0 : i64, scratch_operands = 0 : i64, tpu.core_type = #tpu.core_type<tc>, window_params = [{transform_indices = @transform_0, window_bounds = array<i64: 8, 34>}, {pipeline_mode = #tpu.pipeline_mode<synchronous>, transform_indices = @transform_1, window_bounds = array<i64: 34, 64>}, {pipeline_mode = #tpu.pipeline_mode<synchronous>, transform_indices = @transform_2, window_bounds = array<i64: 1, 64>}, {pipeline_mode = #tpu.pipeline_mode<synchronous>, transform_indices = @transform_3, window_bounds = array<i64: 64, 32>}, {pipeline_mode = #tpu.pipeline_mode<synchronous>, transform_indices = @transform_4, window_bounds = array<i64: 1, 32>}, {pipeline_mode = #tpu.pipeline_mode<synchronous>, transform_indices = @transform_5, window_bounds = array<i64: 32, 8>}, {pipeline_mode = #tpu.pipeline_mode<synchronous>, transform_indices = @transform_6, window_bounds = array<i64: 1, 8>}, {transform_indices = @transform_7, window_bounds = array<i64: 8, 8>}]} {
    %c0 = arith.constant 0 : index
    %c0_0 = arith.constant 0 : index
    %0 = vector.load %arg1[%c0, %c0_0] : memref<8x34xf32, #tpu.memory_space<vmem>>, vector<8x34xf32>
    %1 = arith.truncf %0 : vector<8x34xf32> to vector<8x34xbf16>
    %c0_1 = arith.constant 0 : index
    %c0_2 = arith.constant 0 : index
    %2 = vector.load %arg2[%c0_1, %c0_2] : memref<34x64xbf16, #tpu.memory_space<vmem>>, vector<34x64xbf16>
    %cst = arith.constant dense<0.000000e+00> : vector<8x64xf32>
    %3 = tpu.matmul %1, %2, %cst {dimension_numbers = #tpu.dot_dimension_numbers<[1], [0], [0], [1], [0, 0, 1, 1], [], []>} : vector<8x34xbf16>, vector<34x64xbf16>, vector<8x64xf32> -> vector<8x64xf32>
    %c0_3 = arith.constant 0 : index
    %c0_4 = arith.constant 0 : index
    %4 = vector.load %arg3[%c0_3, %c0_4] : memref<1x64xf32, #tpu.memory_space<vmem>>, vector<1x64xf32>
    %5 = vector.broadcast %4 : vector<1x64xf32> to vector<8x64xf32>
    %6 = arith.addf %3, %5 : vector<8x64xf32>
    %cst_5 = arith.constant 0.000000e+00 : f32
    %7 = vector.broadcast %cst_5 : f32 to vector<8x64xf32>
    %8 = arith.maximumf %6, %7 : vector<8x64xf32>
    %9 = arith.truncf %8 : vector<8x64xf32> to vector<8x64xbf16>
    %c0_6 = arith.constant 0 : index
    %c0_7 = arith.constant 0 : index
    %10 = vector.load %arg4[%c0_6, %c0_7] : memref<64x32xbf16, #tpu.memory_space<vmem>>, vector<64x32xbf16>
    %cst_8 = arith.constant dense<0.000000e+00> : vector<8x32xf32>
    %11 = tpu.matmul %9, %10, %cst_8 {dimension_numbers = #tpu.dot_dimension_numbers<[1], [0], [0], [1], [0, 0, 1, 1], [], []>} : vector<8x64xbf16>, vector<64x32xbf16>, vector<8x32xf32> -> vector<8x32xf32>
    %c0_9 = arith.constant 0 : index
    %c0_10 = arith.constant 0 : index
    %12 = vector.load %arg5[%c0_9, %c0_10] : memref<1x32xf32, #tpu.memory_space<vmem>>, vector<1x32xf32>
    %13 = vector.broadcast %12 : vector<1x32xf32> to vector<8x32xf32>
    %14 = arith.addf %11, %13 : vector<8x32xf32>
    %cst_11 = arith.constant 0.000000e+00 : f32
    %15 = vector.broadcast %cst_11 : f32 to vector<8x32xf32>
    %16 = arith.maximumf %14, %15 : vector<8x32xf32>
    %17 = arith.truncf %16 : vector<8x32xf32> to vector<8x32xbf16>
    %c0_12 = arith.constant 0 : index
    %c0_13 = arith.constant 0 : index
    %18 = vector.load %arg6[%c0_12, %c0_13] : memref<32x8xbf16, #tpu.memory_space<vmem>>, vector<32x8xbf16>
    %cst_14 = arith.constant dense<0.000000e+00> : vector<8x8xf32>
    %19 = tpu.matmul %17, %18, %cst_14 {dimension_numbers = #tpu.dot_dimension_numbers<[1], [0], [0], [1], [0, 0, 1, 1], [], []>} : vector<8x32xbf16>, vector<32x8xbf16>, vector<8x8xf32> -> vector<8x8xf32>
    %c0_15 = arith.constant 0 : index
    %c0_16 = arith.constant 0 : index
    %20 = vector.load %arg7[%c0_15, %c0_16] : memref<1x8xf32, #tpu.memory_space<vmem>>, vector<1x8xf32>
    %21 = vector.broadcast %20 : vector<1x8xf32> to vector<8x8xf32>
    %22 = arith.addf %19, %21 : vector<8x8xf32>
    %c0_17 = arith.constant 0 : index
    %c0_18 = arith.constant 0 : index
    %23 = vector.load %arg8[%c0_17, %c0_18] : memref<8x8xf32, #tpu.memory_space<vmem>>, vector<8x8xf32>
    tpu.vector_store %arg8[%c0_17, %c0_18], %22 {strides = array<i32>} : memref<8x8xf32, #tpu.memory_space<vmem>>, vector<8x8xf32>,
    return
  }
  func.func @transform_0(%arg0: i32) -> (i32, i32) {
    %c0_i32 = arith.constant 0 : i32
    %c0_i32_0 = arith.constant 0 : i32
    return %arg0, %c0_i32 : i32, i32
  }
  func.func @transform_1(%arg0: i32) -> (i32, i32) {
    %c0_i32 = arith.constant 0 : i32
    %c0_i32_0 = arith.constant 0 : i32
    %c0_i32_1 = arith.constant 0 : i32
    return %c0_i32, %c0_i32_0 : i32, i32
  }
  func.func @transform_2(%arg0: i32) -> (i32, i32) {
    %c0_i32 = arith.constant 0 : i32
    %c0_i32_0 = arith.constant 0 : i32
    %c0_i32_1 = arith.constant 0 : i32
    return %c0_i32, %c0_i32_0 : i32, i32
  }
  func.func @transform_3(%arg0: i32) -> (i32, i32) {
    %c0_i32 = arith.constant 0 : i32
    %c0_i32_0 = arith.constant 0 : i32
    %c0_i32_1 = arith.constant 0 : i32
    return %c0_i32, %c0_i32_0 : i32, i32
  }
  func.func @transform_4(%arg0: i32) -> (i32, i32) {
    %c0_i32 = arith.constant 0 : i32
    %c0_i32_0 = arith.constant 0 : i32
    %c0_i32_1 = arith.constant 0 : i32
    return %c0_i32, %c0_i32_0 : i32, i32
  }
  func.func @transform_5(%arg0: i32) -> (i32, i32) {
    %c0_i32 = arith.constant 0 : i32
    %c0_i32_0 = arith.constant 0 : i32
    %c0_i32_1 = arith.constant 0 : i32
    return %c0_i32, %c0_i32_0 : i32, i32
  }
  func.func @transform_6(%arg0: i32) -> (i32, i32) {
    %c0_i32 = arith.constant 0 : i32
    %c0_i32_0 = arith.constant 0 : i32
    %c0_i32_1 = arith.constant 0 : i32
    return %c0_i32, %c0_i32_0 : i32, i32
  }
  func.func @transform_7(%arg0: i32) -> (i32, i32) {
    %c0_i32 = arith.constant 0 : i32
    %c0_i32_0 = arith.constant 0 : i32
    return %arg0, %c0_i32 : i32, i32
  }
}

</mosaic_0001>

<llo_original>
// kernel: _forward_padded.1
$region0: #{_forward_padded.1}
  #allocation0 [shape = 'u32[]', space=smem, size = 0x4, offset = 0x4, fixed_abs, tag = 'smem constant byte address 0x4 - core index']
  #allocation1 [shape = 'u32[144,128]{1,0:T(1,128)}', space=vmem, size = 0x12000, scoped, tag = 'internal scratch']
  %s0 = inlined_call_operand.vmem [shape: f32[8,34], index: 0, kind: input, shape index: {}]
  %s1 = inlined_call_operand.vmem [shape: bf16[34,64], index: 1, kind: input, shape index: {}]
  %s2 = inlined_call_operand.vmem [shape: f32[1,64], index: 2, kind: input, shape index: {}]
  %s3 = inlined_call_operand.vmem [shape: bf16[64,32], index: 3, kind: input, shape index: {}]
  %s4 = inlined_call_operand.vmem [shape: f32[1,32], index: 4, kind: input, shape index: {}]
  %s5 = inlined_call_operand.vmem [shape: bf16[32,8], index: 5, kind: input, shape index: {}]
  %s6 = inlined_call_operand.vmem [shape: f32[1,8], index: 6, kind: input, shape index: {}]
  %s7 = inlined_call_operand.hbm [shape: f32[8,8], index: 7, kind: output, shape index: {}]
  %s8 = sld [smem:[#allocation0]]
  $region38: #{_forward_padded.1} parent=0
    _
  %s10 = ssub.s32 1, %s8
  %s11 = scalar_select 0, %s10, %s8
  $region1: #{_forward_padded.1} parent=0
    #allocation2 [shape = 'u8[4096]{0}', space=vmem, size = 0x1000, scoped, tag = 'output window, operand 0, single buffered']
    #allocation3 [shape = 's32[1]{0}', space=sflag, size = 0x4, scoped, tag = 'scoped memory for _forward_padded.1']
    %12 = vsyncpa [#allocation3], 0
    // Predicated region
    $region2: #{_forward_padded.1} parent=1 // pred_check
      _
    $region3: #{_forward_padded.1} parent=1 // pred_check_branch
      %14 = sbr.rel (0) target = $region5
    $region4: #{_forward_padded.1} parent=1 // pred_region
      _
    $region5: #{_forward_padded.1} parent=1 // pred_fallthru
      _
    // Predicated region
    $region6: #{_forward_padded.1} parent=1 // pred_check
      _
    $region7: #{_forward_padded.1} parent=1 // pred_check_branch
      %16 = sbr.rel (0) target = $region9
    $region8: #{_forward_padded.1} parent=1 // pred_region
      _
    $region9: #{_forward_padded.1} parent=1 // pred_fallthru
      _
    // Predicated region
    $region10: #{_forward_padded.1} parent=1 // pred_check
      _
    $region11: #{_forward_padded.1} parent=1 // pred_check_branch
      %18 = sbr.rel (0) target = $region13
    $region12: #{_forward_padded.1} parent=1 // pred_region
      _
    $region13: #{_forward_padded.1} parent=1 // pred_fallthru
      _
    // Predicated region
    $region14: #{_forward_padded.1} parent=1 // pred_check
      _
    $region15: #{_forward_padded.1} parent=1 // pred_check_branch
      %20 = sbr.rel (0) target = $region17
    $region16: #{_forward_padded.1} parent=1 // pred_region
      _
    $region17: #{_forward_padded.1} parent=1 // pred_fallthru
      _
    // Predicated region
    $region18: #{_forward_padded.1} parent=1 // pred_check
      _
    $region19: #{_forward_padded.1} parent=1 // pred_check_branch
      %22 = sbr.rel (0) target = $region21
    $region20: #{_forward_padded.1} parent=1 // pred_region
      _
    $region21: #{_forward_padded.1} parent=1 // pred_fallthru
      _
    // Predicated region
    $region22: #{_forward_padded.1} parent=1 // pred_check
      _
    $region23: #{_forward_padded.1} parent=1 // pred_check_branch
      %24 = sbr.rel (0) target = $region25
    $region24: #{_forward_padded.1} parent=1 // pred_region
      _
    $region25: #{_forward_padded.1} parent=1 // pred_fallthru
      _
    // Predicated region
    $region26: #{_forward_padded.1} parent=1 // pred_check
      _
    $region27: #{_forward_padded.1} parent=1 // pred_check_branch
      %26 = sbr.rel (0) target = $region29
    $region28: #{_forward_padded.1} parent=1 // pred_region
      _
    $region29: #{_forward_padded.1} parent=1 // pred_fallthru
      _
    %v28 = vld [vmem:[%s0] sm:$0xff]
    %v29 = vpack.c.bf16 %v28, %v28
    %v30 = vld [vmem:[%s1] sm:$0xf]
    %v31 = vld [vmem:[%s1 + $0x4] sm:$0xf]
    %v32 = vld [vmem:[%s1 + $0x8] sm:$0xf]
    %v33 = vld [vmem:[%s1 + $0xc] sm:$0xf]
    %v34 = vld [vmem:[%s1 + $0x10] sm:$0x1]
    %v35 = vld [vmem:[%s2] sm:$0x1]
    %v37 = vlaneseq
    %v38 = vshrl.u32 %v37, 7
    %v39 = vsub.s32 0, %v38
    %v40 = vrot.slane %v35, %v39
    %v47 = vunpack.c.l.b16 %v30
    %v48 = vunpack.c.l.b16 %v31
    %v49 = vunpack.c.l.b16 %v32
    %v50 = vunpack.c.l.b16 %v33
    %v51 = vunpack.c.l.b16 %v34
    %v52 = vpack.c.b16 %v48, %v47
    %v53 = vpack.c.b16 %v50, %v49
    %v54 = vpack.c.b16 %v51, %v51
    %vm57 = vcmask 277504
    %v59 = vsel %vm57, %v29, 0
    %vm61 = vcmask 1040384
    %v63 = vsel %vm61, %v54, 0
    %65 = vmatprep.subr.bf16.mxu0 0
    %66 = vmatpush1.bf16.msra.mxu0 0
    %67 = vmatprep.subr.bf16.mxu0 0
    %68 = vmatpush1.bf16.msra.mxu0 0
    %69 = vmatprep.subr.bf16.mxu0 0
    %70 = vmatpush1.bf16.msra.mxu0 0
    %71 = vmatprep.subr.bf16.mxu0 0
    %72 = vmatpush1.bf16.msra.mxu0 0
    %73 = vmatprep.subr.bf16.mxu0 0
    %74 = vmatpush1.bf16.msra.mxu0 0
    %75 = vmatprep.subr.bf16.mxu0 0
    %76 = vmatpush1.bf16.msra.mxu0 %v63
    %77 = vmatprep.subr.bf16.mxu0 0
    %78 = vmatpush1.bf16.msra.mxu0 %v53
    %79 = vmatprep.subr.bf16.mxu0 0
    %80 = vmatpush1.bf16.msra.mxu0 %v52
    %81 = vmatprep.subr.bf16.mxu0 0
    %82 = vmatpush2.bf16.msra.mxu0 0
    %83 = vmatprep.subr.bf16.mxu0 0
    %84 = vmatpush2.bf16.msra.mxu0 0
    %85 = vmatprep.subr.bf16.mxu0 0
    %86 = vmatpush2.bf16.msra.mxu0 0
    %87 = vmatprep.subr.bf16.mxu0 0
    %88 = vmatpush2.bf16.msra.mxu0 0
    %89 = vmatprep.subr.bf16.mxu0 0
    %90 = vmatpush2.bf16.msra.mxu0 0
    %91 = vmatprep.subr.bf16.mxu0 0
    %92 = vmatpush2.bf16.msra.mxu0 0
    %93 = vmatprep.subr.bf16.mxu0 0
    %94 = vmatpush2.bf16.msra.mxu0 0
    %95 = vmatprep.subr.bf16.mxu0 0
    %96 = vmatpush2.bf16.msra.mxu0 0
    %97 = vmatprep.mubr.bf16.mxu0 0
    %98 = vmatmul.mubr.bf16.gmra.mxu0 %v59
    %v99 = vpop.f32.mrf.mxu0
    %v100 = vadd.f32 %v40, %v99
    %v101 = vpop.f32.mrf.mxu0
    %v102 = vpop.f32.mrf.mxu0
    %v103 = vpop.f32.mrf.mxu0
    %104 = vdwg.mxu0
    %v105 = vmax.f32 %v100, 0.0
    %v106 = vpack.c.bf16 %v105, %v105
    %v107 = vld [vmem:[%s3] sm:$0xf]
    %v108 = vld [vmem:[%s3 + $0x4] sm:$0xf]
    %v109 = vld [vmem:[%s3 + $0x8] sm:$0xf]
    %v110 = vld [vmem:[%s3 + $0xc] sm:$0xf]
    %v111 = vld [vmem:[%s3 + $0x10] sm:$0xf]
    %v112 = vld [vmem:[%s3 + $0x14] sm:$0xf]
    %v113 = vld [vmem:[%s3 + $0x18] sm:$0xf]
    %v114 = vld [vmem:[%s3 + $0x1c] sm:$0xf]
    %v115 = vld [vmem:[%s4] sm:$0x1]
    %v117 = vlaneseq
    %v118 = vshrl.u32 %v117, 7
    %v119 = vsub.s32 0, %v118
    %v120 = vrot.slane %v115, %v119
    %v130 = vunpack.c.l.b16 %v107
    %v131 = vunpack.c.l.b16 %v108
    %v132 = vunpack.c.l.b16 %v109
    %v133 = vunpack.c.l.b16 %v110
    %v134 = vunpack.c.l.b16 %v111
    %v135 = vunpack.c.l.b16 %v112
    %v136 = vunpack.c.l.b16 %v113
    %v137 = vunpack.c.l.b16 %v114
    %v138 = vpack.c.b16 %v131, %v130
    %v139 = vpack.c.b16 %v133, %v132
    %v140 = vpack.c.b16 %v135, %v134
    %v141 = vpack.c.b16 %v137, %v136
    %vm146 = vcmask 523264
    %v148 = vsel %vm146, %v106, 0
    %150 = vmatprep.subr.bf16.mxu0 0
    %151 = vmatpush1.bf16.msra.mxu0 0
    %152 = vmatprep.subr.bf16.mxu0 0
    %153 = vmatpush1.bf16.msra.mxu0 0
    %154 = vmatprep.subr.bf16.mxu0 0
    %155 = vmatpush1.bf16.msra.mxu0 0
    %156 = vmatprep.subr.bf16.mxu0 0
    %157 = vmatpush1.bf16.msra.mxu0 0
    %158 = vmatprep.subr.bf16.mxu0 0
    %159 = vmatpush1.bf16.msra.mxu0 %v141
    %160 = vmatprep.subr.bf16.mxu0 0
    %161 = vmatpush1.bf16.msra.mxu0 %v140
    %162 = vmatprep.subr.bf16.mxu0 0
    %163 = vmatpush1.bf16.msra.mxu0 %v139
    %164 = vmatprep.subr.bf16.mxu0 0
    %165 = vmatpush1.bf16.msra.mxu0 %v138
    %166 = vmatprep.subr.bf16.mxu0 0
    %167 = vmatpush2.bf16.msra.mxu0 0
    %168 = vmatprep.subr.bf16.mxu0 0
    %169 = vmatpush2.bf16.msra.mxu0 0
    %170 = vmatprep.subr.bf16.mxu0 0
    %171 = vmatpush2.bf16.msra.mxu0 0
    %172 = vmatprep.subr.bf16.mxu0 0
    %173 = vmatpush2.bf16.msra.mxu0 0
    %174 = vmatprep.subr.bf16.mxu0 0
    %175 = vmatpush2.bf16.msra.mxu0 0
    %176 = vmatprep.subr.bf16.mxu0 0
    %177 = vmatpush2.bf16.msra.mxu0 0
    %178 = vmatprep.subr.bf16.mxu0 0
    %179 = vmatpush2.bf16.msra.mxu0 0
    %180 = vmatprep.subr.bf16.mxu0 0
    %181 = vmatpush2.bf16.msra.mxu0 0
    %182 = vmatprep.mubr.bf16.mxu0 0
    %183 = vmatmul.mubr.bf16.gmra.mxu0 %v148
    %v184 = vpop.f32.mrf.mxu0
    %v185 = vadd.f32 %v120, %v184
    %v186 = vpop.f32.mrf.mxu0
    %v187 = vpop.f32.mrf.mxu0
    %v188 = vpop.f32.mrf.mxu0
    %189 = vdwg.mxu0
    %v190 = vmax.f32 %v185, 0.0
    %v191 = vpack.c.bf16 %v190, %v190
    %v192 = vld [vmem:[%s5] sm:$0xf]
    %v193 = vld [vmem:[%s5 + $0x4] sm:$0xf]
    %v194 = vld [vmem:[%s5 + $0x8] sm:$0xf]
    %v195 = vld [vmem:[%s5 + $0xc] sm:$0xf]
    %v196 = vld [vmem:[%s6] sm:$0x1]
    %v198 = vlaneseq
    %v199 = vshrl.u32 %v198, 7
    %v200 = vsub.s32 0, %v199
    %v201 = vrot.slane %v196, %v200
    %v207 = vunpack.c.l.b16 %v192
    %v208 = vunpack.c.l.b16 %v193
    %v209 = vunpack.c.l.b16 %v194
    %v210 = vunpack.c.l.b16 %v195
    %v211 = vpack.c.b16 %v208, %v207
    %v212 = vpack.c.b16 %v210, %v209
    %vm215 = vcmask 261120
    %v217 = vsel %vm215, %v191, 0
    %219 = vmatprep.subr.bf16.mxu0 0
    %220 = vmatpush1.bf16.msra.mxu0 0
    %221 = vmatprep.subr.bf16.mxu0 0
    %222 = vmatpush1.bf16.msra.mxu0 0
    %223 = vmatprep.subr.bf16.mxu0 0
    %224 = vmatpush1.bf16.msra.mxu0 0
    %225 = vmatprep.subr.bf16.mxu0 0
    %226 = vmatpush1.bf16.msra.mxu0 0
    %227 = vmatprep.subr.bf16.mxu0 0
    %228 = vmatpush1.bf16.msra.mxu0 0
    %229 = vmatprep.subr.bf16.mxu0 0
    %230 = vmatpush1.bf16.msra.mxu0 0
    %231 = vmatprep.subr.bf16.mxu0 0
    %232 = vmatpush1.bf16.msra.mxu0 %v212
    %233 = vmatprep.subr.bf16.mxu0 0
    %234 = vmatpush1.bf16.msra.mxu0 %v211
    %235 = vmatprep.subr.bf16.mxu0 0
    %236 = vmatpush2.bf16.msra.mxu0 0
    %237 = vmatprep.subr.bf16.mxu0 0
    %238 = vmatpush2.bf16.msra.mxu0 0
    %239 = vmatprep.subr.bf16.mxu0 0
    %240 = vmatpush2.bf16.msra.mxu0 0
    %241 = vmatprep.subr.bf16.mxu0 0
    %242 = vmatpush2.bf16.msra.mxu0 0
    %243 = vmatprep.subr.bf16.mxu0 0
    %244 = vmatpush2.bf16.msra.mxu0 0
    %245 = vmatprep.subr.bf16.mxu0 0
    %246 = vmatpush2.bf16.msra.mxu0 0
    %247 = vmatprep.subr.bf16.mxu0 0
    %248 = vmatpush2.bf16.msra.mxu0 0
    %249 = vmatprep.subr.bf16.mxu0 0
    %250 = vmatpush2.bf16.msra.mxu0 0
    %251 = vmatprep.mubr.bf16.mxu0 0
    %252 = vmatmul.mubr.bf16.gmra.mxu0 %v217
    %v253 = vpop.f32.mrf.mxu0
    %v254 = vadd.f32 %v201, %v253
    %v255 = vpop.f32.mrf.mxu0
    %v256 = vpop.f32.mrf.mxu0
    %v257 = vpop.f32.mrf.mxu0
    %258 = vdwg.mxu0
    %vm259 = vcmask 64512
    %260 = vst.msk [vmem:[#allocation2] sm:$0xff] %vm259, %v254
    // Predicated region
    $region30: #{_forward_padded.1} parent=1 // pred_check
      _
    $region31: #{_forward_padded.1} parent=1 // pred_check_branch
      %262 = sbr.rel (0) target = $region33
    $region32: #{_forward_padded.1} parent=1 // pred_region
      %s264 = ssub.s32 128, 128
      %265 = vsyncadd [#allocation3], %s264
      %s267 = sshll.u32 [#allocation2], 4
      %s268 = int_to_ptr.vmem [resolvable:$true] %s267
      %270 = dma.vmem_to_hbm [thread:$0]  %s268, 128, %s7, [#allocation3]
    $region33: #{_forward_padded.1} parent=1 // pred_fallthru
      _
    // Predicated region
    $region34: #{_forward_padded.1} parent=1 // pred_check
      _
    $region35: #{_forward_padded.1} parent=1 // pred_check_branch
      %272 = sbr.rel (0) target = $region37
    $region36: #{_forward_padded.1} parent=1 // pred_region
      %273 = dma.done [#allocation3], 128
    $region37: #{_forward_padded.1} parent=1 // pred_fallthru
      _
    %274 = vsyncpa [#allocation3], 1

</llo_original>
